<compile_context>
chip_gen: v6e
topology: v6e:2x2x1
jax: 0.10.0
libtpu: 0.0.40
codegen_flags: <defaults>
</compile_context>

<pallas_src>
import functools

import jax
import jax.numpy as jnp
from jax.experimental import pallas as pl
from jax.experimental.pallas import tpu as pltpu


DROP_RATE = 0.5
HIDDEN_LAYERS = [128, 64, 32]


def _round_up(x, m):
    return (x + m - 1) // m * m


def _deep_biod_kernel(f_ref, u1_ref, u2_ref, u3_ref,
                      w1_ref, b1_ref, w2_ref, b2_ref,
                      w3_ref, b3_ref, w4_ref, b4_ref,
                      out_ref):
    """(Linear -> ReLU -> Dropout) x3 -> Linear -> Sigmoid for one batch tile."""
    p = jnp.float32(DROP_RATE)

    # Layer 1: F -> 128  (bf16 MXU matmul, f32 accumulation)
    h = jnp.dot(f_ref[...], w1_ref[...], preferred_element_type=jnp.float32)
    h = jnp.maximum(h + b1_ref[...], 0.0)
    # Dropout: keep with prob 1-p. The 1/(1-p) scale is folded into w2.
    h = jnp.where(u1_ref[...] >= p, h, 0.0)

    # Layer 2: 128 -> 64
    h = jnp.dot(h.astype(jnp.bfloat16), w2_ref[...],
                preferred_element_type=jnp.float32)
    h = jnp.maximum(h + b2_ref[...], 0.0)
    h = jnp.where(u2_ref[...] >= p, h, 0.0)

    # Layer 3: 64 -> 32
    h = jnp.dot(h.astype(jnp.bfloat16), w3_ref[...],
                preferred_element_type=jnp.float32)
    h = jnp.maximum(h + b3_ref[...], 0.0)
    h = jnp.where(u3_ref[...] >= p, h, 0.0)

    # Output layer: 32 -> 1. An N=1 MXU matmul wastes 255/256 lanes; do a
    # VPU broadcast-multiply + lane reduce instead. Sigmoid via EUP exp.
    logits = jnp.sum(h * w4_ref[...], axis=-1, keepdims=True) + b4_ref[...]
    out_ref[...] = 1.0 / (1.0 + jnp.exp(-logits))


def _choose_tile_b(batch):
    # Largest-tile-that-fits heuristic, capped so 2x double-buffered input +
    # mask tiles + live activations stay well under v7x's 64 MiB VMEM
    # (and v5e's 16 MiB scoped default).
    if batch <= 256:
        return _round_up(batch, 8)
    return min(_round_up(batch, 256), 1024)


@jax.jit
def deep_biod_head(fusion, dropout_u, kparams):
    """Run the DeepBioD MLP head on a [B, fusion_shape] fusion tensor."""
    B, F = fusion.shape
    H1, H2, H3 = HIDDEN_LAYERS

    tile_b = _choose_tile_b(B)
    B_pad = _round_up(B, tile_b)
    grid = (B_pad // tile_b,)

    u1, u2, u3 = dropout_u
    (w1, b1), (w2, b2), (w3, b3), (w4, b4) = kparams

    def pad_b(a):
        if a.shape[0] == B_pad:
            return a
        return jnp.pad(a, ((0, B_pad - a.shape[0]), (0, 0)))

    fusion_p = pad_b(fusion.astype(jnp.bfloat16))
    u1p, u2p, u3p = pad_b(u1), pad_b(u2), pad_b(u3)

    def tile_spec(n):           # batch-tiled arrays
        return pl.BlockSpec((tile_b, n), lambda i: (i, 0))

    def full_spec(shape):       # weights/biases stay resident across tiles
        return pl.BlockSpec(shape, lambda i: (0, 0))

    flops = 2 * B_pad * (F * H1 + H1 * H2 + H2 * H3 + H3 * 1)
    param_bytes = sum(int(a.size) * a.dtype.itemsize
                      for pair in kparams for a in pair)
    bytes_accessed = (int(fusion_p.size) * 2
                      + (int(u1p.size) + int(u2p.size) + int(u3p.size)) * 4
                      + param_bytes + B_pad * 4)

    out = pl.pallas_call(
        _deep_biod_kernel,
        out_shape=jax.ShapeDtypeStruct((B_pad, 1), jnp.float32),
        grid=grid,
        in_specs=[
            tile_spec(F),
            tile_spec(H1), tile_spec(H2), tile_spec(H3),
            full_spec(w1.shape), full_spec(b1.shape),
            full_spec(w2.shape), full_spec(b2.shape),
            full_spec(w3.shape), full_spec(b3.shape),
            full_spec(w4.shape), full_spec(b4.shape),
        ],
        out_specs=tile_spec(1),
        compiler_params=pltpu.CompilerParams(
            dimension_semantics=("parallel",)),
        cost_estimate=pl.CostEstimate(
            flops=int(flops),
            transcendentals=int(B_pad),
            bytes_accessed=int(bytes_accessed)),
    )(fusion_p, u1p, u2p, u3p, w1, b1, w2, b2, w3, b3, w4, b4)

    return out[:B]


def make_params(key, fusion_shape):
    """Deterministic nn.Linear-style init: U(-1/sqrt(in), 1/sqrt(in)), f32."""
    layers = [fusion_shape] + HIDDEN_LAYERS + [1]
    params = []
    for fan_in, fan_out in zip(layers, layers[1:]):
        key, kw, kb = jax.random.split(key, 3)
        bound = 1.0 / float(fan_in) ** 0.5
        w = jax.random.uniform(kw, (fan_in, fan_out), jnp.float32, -bound, bound)
        b = jax.random.uniform(kb, (1, fan_out), jnp.float32, -bound, bound)
        params.append((w, b))
    return params


def prepare_kernel_params(params):
    """Kernel-side prep: bf16 weights for the MXU; dropout's 1/(1-p) folded
    into the weight matrix that consumes each dropped activation; final layer
    as a (1, 32) f32 row for the VPU mul + reduce."""
    inv_keep = 1.0 / (1.0 - DROP_RATE)
    (w1, b1), (w2, b2), (w3, b3), (w4, b4) = params
    kp1 = (w1.astype(jnp.bfloat16), b1)
    kp2 = ((w2 * inv_keep).astype(jnp.bfloat16), b2)
    kp3 = ((w3 * inv_keep).astype(jnp.bfloat16), b3)
    kp4 = ((w4 * inv_keep).T.astype(jnp.float32), b4)   # (1, 32), (1, 1)
    return (kp1, kp2, kp3, kp4)


def make_dropout_uniforms(key, batch):
    """Host-side uniforms in [0,1) for the three dropout layers
    (torch.dropout(p, train=True) semantics: zero with prob p)."""
    k1, k2, k3 = jax.random.split(key, 3)
    return (jax.random.uniform(k1, (batch, HIDDEN_LAYERS[0]), jnp.float32),
            jax.random.uniform(k2, (batch, HIDDEN_LAYERS[1]), jnp.float32),
            jax.random.uniform(k3, (batch, HIDDEN_LAYERS[2]), jnp.float32))


def fusion_model(x, y):
    """Stand-in for the external fusion model: concatenate flattened features."""
    B = x.shape[0]
    fusion = jnp.concatenate(
        [x.reshape(B, -1), y.reshape(B, -1)], axis=-1).astype(jnp.float32)
    return fusion, None


def deep_biod_forward(x, y, params, dropout_key):
    fusion, _ = fusion_model(x, y)
    fusion_shape = fusion.shape[-1]
    if fusion_shape > 1:
        kparams = prepare_kernel_params(params)
        dropout_u = make_dropout_uniforms(dropout_key, fusion.shape[0])
        return deep_biod_head(fusion, dropout_u, kparams)
    return fusion


if __name__ == "__main__":
    key = jax.random.PRNGKey(0)
    kx, ky, kp, kd = jax.random.split(key, 4)

    B, DX, DY = 8, 32, 32          # fusion_shape = 64
    x = jax.random.normal(kx, (B, DX), jnp.float32)
    y = jax.random.normal(ky, (B, DY), jnp.float32)

    params = make_params(kp, DX + DY)

    out = deep_biod_forward(x, y, params, kd)
    out = jax.block_until_ready(out)

    assert out.shape == (B, 1)
    assert bool(jnp.all((out >= 0.0) & (out <= 1.0)))
    print("KERNEL_OK")
</pallas_src>

<mosaic_0001>
module attributes {stable_mosaic.version = 11 : i64} {
  func.func @_deep_biod_kernel(%arg0: i32, %arg1: memref<8x64xbf16, #tpu.memory_space<vmem>>, %arg2: memref<8x128xf32, #tpu.memory_space<vmem>>, %arg3: memref<8x64xf32, #tpu.memory_space<vmem>>, %arg4: memref<8x32xf32, #tpu.memory_space<vmem>>, %arg5: memref<64x128xbf16, #tpu.memory_space<vmem>>, %arg6: memref<1x128xf32, #tpu.memory_space<vmem>>, %arg7: memref<128x64xbf16, #tpu.memory_space<vmem>>, %arg8: memref<1x64xf32, #tpu.memory_space<vmem>>, %arg9: memref<64x32xbf16, #tpu.memory_space<vmem>>, %arg10: memref<1x32xf32, #tpu.memory_space<vmem>>, %arg11: memref<1x32xf32, #tpu.memory_space<vmem>>, %arg12: memref<1x1xf32, #tpu.memory_space<vmem>>, %arg13: memref<8x1xf32, #tpu.memory_space<vmem>>) attributes {dimension_semantics = [#tpu.dimension_semantics<parallel>], iteration_bounds = array<i64: 1>, scalar_prefetch = 0 : i64, scratch_operands = 0 : i64, tpu.core_type = #tpu.core_type<tc>, window_params = [{transform_indices = @transform_0, window_bounds = array<i64: 8, 64>}, {transform_indices = @transform_1, window_bounds = array<i64: 8, 128>}, {transform_indices = @transform_2, window_bounds = array<i64: 8, 64>}, {transform_indices = @transform_3, window_bounds = array<i64: 8, 32>}, {pipeline_mode = #tpu.pipeline_mode<synchronous>, transform_indices = @transform_4, window_bounds = array<i64: 64, 128>}, {pipeline_mode = #tpu.pipeline_mode<synchronous>, transform_indices = @transform_5, window_bounds = array<i64: 1, 128>}, {pipeline_mode = #tpu.pipeline_mode<synchronous>, transform_indices = @transform_6, window_bounds = array<i64: 128, 64>}, {pipeline_mode = #tpu.pipeline_mode<synchronous>, transform_indices = @transform_7, window_bounds = array<i64: 1, 64>}, {pipeline_mode = #tpu.pipeline_mode<synchronous>, transform_indices = @transform_8, window_bounds = array<i64: 64, 32>}, {pipeline_mode = #tpu.pipeline_mode<synchronous>, transform_indices = @transform_9, window_bounds = array<i64: 1, 32>}, {pipeline_mode = #tpu.pipeline_mode<synchronous>, transform_indices = @transform_10, window_bounds = array<i64: 1, 32>}, {pipeline_mode = #tpu.pipeline_mode<synchronous>, transform_indices = @transform_11, window_bounds = array<i64: 1, 1>}, {transform_indices = @transform_12, window_bounds = array<i64: 8, 1>}]} {
    %c0 = arith.constant 0 : index
    %c0_0 = arith.constant 0 : index
    %0 = vector.load %arg1[%c0, %c0_0] : memref<8x64xbf16, #tpu.memory_space<vmem>>, vector<8x64xbf16>
    %c0_1 = arith.constant 0 : index
    %c0_2 = arith.constant 0 : index
    %1 = vector.load %arg5[%c0_1, %c0_2] : memref<64x128xbf16, #tpu.memory_space<vmem>>, vector<64x128xbf16>
    %cst = arith.constant dense<0.000000e+00> : vector<8x128xf32>
    %2 = tpu.matmul %0, %1, %cst {dimension_numbers = #tpu.dot_dimension_numbers<[1], [0], [0], [1], [0, 0, 1, 1], [], []>} : vector<8x64xbf16>, vector<64x128xbf16>, vector<8x128xf32> -> vector<8x128xf32>
    %c0_3 = arith.constant 0 : index
    %c0_4 = arith.constant 0 : index
    %3 = vector.load %arg6[%c0_3, %c0_4] : memref<1x128xf32, #tpu.memory_space<vmem>>, vector<1x128xf32>
    %4 = vector.broadcast %3 : vector<1x128xf32> to vector<8x128xf32>
    %5 = arith.addf %2, %4 : vector<8x128xf32>
    %cst_5 = arith.constant 0.000000e+00 : f32
    %6 = vector.broadcast %cst_5 : f32 to vector<8x128xf32>
    %7 = arith.maximumf %5, %6 : vector<8x128xf32>
    %c0_6 = arith.constant 0 : index
    %c0_7 = arith.constant 0 : index
    %8 = vector.load %arg2[%c0_6, %c0_7] : memref<8x128xf32, #tpu.memory_space<vmem>>, vector<8x128xf32>
    %cst_8 = arith.constant 5.000000e-01 : f32
    %9 = vector.broadcast %cst_8 : f32 to vector<8x128xf32>
    %10 = arith.cmpf oge, %8, %9 : vector<8x128xf32>
    %cst_9 = arith.constant 0.000000e+00 : f32
    %11 = vector.broadcast %cst_9 : f32 to vector<8x128xf32>
    %12 = arith.select %10, %7, %11 : vector<8x128xi1>, vector<8x128xf32>
    %13 = arith.truncf %12 : vector<8x128xf32> to vector<8x128xbf16>
    %c0_10 = arith.constant 0 : index
    %c0_11 = arith.constant 0 : index
    %14 = vector.load %arg7[%c0_10, %c0_11] : memref<128x64xbf16, #tpu.memory_space<vmem>>, vector<128x64xbf16>
    %cst_12 = arith.constant dense<0.000000e+00> : vector<8x64xf32>
    %15 = tpu.matmul %13, %14, %cst_12 {dimension_numbers = #tpu.dot_dimension_numbers<[1], [0], [0], [1], [0, 0, 1, 1], [], []>} : vector<8x128xbf16>, vector<128x64xbf16>, vector<8x64xf32> -> vector<8x64xf32>
    %c0_13 = arith.constant 0 : index
    %c0_14 = arith.constant 0 : index
    %16 = vector.load %arg8[%c0_13, %c0_14] : memref<1x64xf32, #tpu.memory_space<vmem>>, vector<1x64xf32>
    %17 = vector.broadcast %16 : vector<1x64xf32> to vector<8x64xf32>
    %18 = arith.addf %15, %17 : vector<8x64xf32>
    %cst_15 = arith.constant 0.000000e+00 : f32
    %19 = vector.broadcast %cst_15 : f32 to vector<8x64xf32>
    %20 = arith.maximumf %18, %19 : vector<8x64xf32>
    %c0_16 = arith.constant 0 : index
    %c0_17 = arith.constant 0 : index
    %21 = vector.load %arg3[%c0_16, %c0_17] : memref<8x64xf32, #tpu.memory_space<vmem>>, vector<8x64xf32>
    %cst_18 = arith.constant 5.000000e-01 : f32
    %22 = vector.broadcast %cst_18 : f32 to vector<8x64xf32>
    %23 = arith.cmpf oge, %21, %22 : vector<8x64xf32>
    %cst_19 = arith.constant 0.000000e+00 : f32
    %24 = vector.broadcast %cst_19 : f32 to vector<8x64xf32>
    %25 = arith.select %23, %20, %24 : vector<8x64xi1>, vector<8x64xf32>
    %26 = arith.truncf %25 : vector<8x64xf32> to vector<8x64xbf16>
    %c0_20 = arith.constant 0 : index
    %c0_21 = arith.constant 0 : index
    %27 = vector.load %arg9[%c0_20, %c0_21] : memref<64x32xbf16, #tpu.memory_space<vmem>>, vector<64x32xbf16>
    %cst_22 = arith.constant dense<0.000000e+00> : vector<8x32xf32>
    %28 = tpu.matmul %26, %27, %cst_22 {dimension_numbers = #tpu.dot_dimension_numbers<[1], [0], [0], [1], [0, 0, 1, 1], [], []>} : vector<8x64xbf16>, vector<64x32xbf16>, vector<8x32xf32> -> vector<8x32xf32>
    %c0_23 = arith.constant 0 : index
    %c0_24 = arith.constant 0 : index
    %29 = vector.load %arg10[%c0_23, %c0_24] : memref<1x32xf32, #tpu.memory_space<vmem>>, vector<1x32xf32>
    %30 = vector.broadcast %29 : vector<1x32xf32> to vector<8x32xf32>
    %31 = arith.addf %28, %30 : vector<8x32xf32>
    %cst_25 = arith.constant 0.000000e+00 : f32
    %32 = vector.broadcast %cst_25 : f32 to vector<8x32xf32>
    %33 = arith.maximumf %31, %32 : vector<8x32xf32>
    %c0_26 = arith.constant 0 : index
    %c0_27 = arith.constant 0 : index
    %34 = vector.load %arg4[%c0_26, %c0_27] : memref<8x32xf32, #tpu.memory_space<vmem>>, vector<8x32xf32>
    %cst_28 = arith.constant 5.000000e-01 : f32
    %35 = vector.broadcast %cst_28 : f32 to vector<8x32xf32>
    %36 = arith.cmpf oge, %34, %35 : vector<8x32xf32>
    %cst_29 = arith.constant 0.000000e+00 : f32
    %37 = vector.broadcast %cst_29 : f32 to vector<8x32xf32>
    %38 = arith.select %36, %33, %37 : vector<8x32xi1>, vector<8x32xf32>
    %c0_30 = arith.constant 0 : index
    %c0_31 = arith.constant 0 : index
    %39 = vector.load %arg11[%c0_30, %c0_31] : memref<1x32xf32, #tpu.memory_space<vmem>>, vector<1x32xf32>
    %40 = vector.broadcast %39 : vector<1x32xf32> to vector<8x32xf32>
    %41 = arith.mulf %38, %40 : vector<8x32xf32>
    %cst_32 = arith.constant dense<0.000000e+00> : vector<8xf32>
    %42 = vector.multi_reduction <add>, %41, %cst_32 [1] : vector<8x32xf32> to vector<8xf32>
    %43 = vector.shape_cast %42 : vector<8xf32> to vector<8x1xf32>
    %c0_33 = arith.constant 0 : index
    %c0_34 = arith.constant 0 : index
    %44 = vector.load %arg12[%c0_33, %c0_34] : memref<1x1xf32, #tpu.memory_space<vmem>>, vector<1x1xf32>
    %45 = vector.broadcast %44 : vector<1x1xf32> to vector<8x1xf32>
    %46 = arith.addf %43, %45 : vector<8x1xf32>
    %cst_35 = arith.constant 0.000000e+00 : f32
    %47 = vector.broadcast %cst_35 : f32 to vector<8x1xf32>
    %48 = arith.subf %47, %46 : vector<8x1xf32>
    %49 = math.exp %48 : vector<8x1xf32>
    %cst_36 = arith.constant 1.000000e+00 : f32
    %50 = vector.broadcast %cst_36 : f32 to vector<8x1xf32>
    %51 = arith.addf %50, %49 : vector<8x1xf32>
    %cst_37 = arith.constant 1.000000e+00 : f32
    %52 = vector.broadcast %cst_37 : f32 to vector<8x1xf32>
    %53 = arith.divf %52, %51 : vector<8x1xf32>
    %c0_38 = arith.constant 0 : index
    %c0_39 = arith.constant 0 : index
    %54 = vector.load %arg13[%c0_38, %c0_39] : memref<8x1xf32, #tpu.memory_space<vmem>>, vector<8x1xf32>
    tpu.vector_store %arg13[%c0_38, %c0_39], %53 {strides = array<i32>} : memref<8x1xf32, #tpu.memory_space<vmem>>, vector<8x1xf32>,
    return
  }
  func.func @transform_0(%arg0: i32) -> (i32, i32) {
    %c0_i32 = arith.constant 0 : i32
    %c0_i32_0 = arith.constant 0 : i32
    return %arg0, %c0_i32 : i32, i32
  }
  func.func @transform_1(%arg0: i32) -> (i32, i32) {
    %c0_i32 = arith.constant 0 : i32
    %c0_i32_0 = arith.constant 0 : i32
    return %arg0, %c0_i32 : i32, i32
  }
  func.func @transform_2(%arg0: i32) -> (i32, i32) {
    %c0_i32 = arith.constant 0 : i32
    %c0_i32_0 = arith.constant 0 : i32
    return %arg0, %c0_i32 : i32, i32
  }
  func.func @transform_3(%arg0: i32) -> (i32, i32) {
    %c0_i32 = arith.constant 0 : i32
    %c0_i32_0 = arith.constant 0 : i32
    return %arg0, %c0_i32 : i32, i32
  }
  func.func @transform_4(%arg0: i32) -> (i32, i32) {
    %c0_i32 = arith.constant 0 : i32
    %c0_i32_0 = arith.constant 0 : i32
    %c0_i32_1 = arith.constant 0 : i32
    return %c0_i32, %c0_i32_0 : i32, i32
  }
  func.func @transform_5(%arg0: i32) -> (i32, i32) {
    %c0_i32 = arith.constant 0 : i32
    %c0_i32_0 = arith.constant 0 : i32
    %c0_i32_1 = arith.constant 0 : i32
    return %c0_i32, %c0_i32_0 : i32, i32
  }
  func.func @transform_6(%arg0: i32) -> (i32, i32) {
    %c0_i32 = arith.constant 0 : i32
    %c0_i32_0 = arith.constant 0 : i32
    %c0_i32_1 = arith.constant 0 : i32
    return %c0_i32, %c0_i32_0 : i32, i32
  }
  func.func @transform_7(%arg0: i32) -> (i32, i32) {
    %c0_i32 = arith.constant 0 : i32
    %c0_i32_0 = arith.constant 0 : i32
    %c0_i32_1 = arith.constant 0 : i32
    return %c0_i32, %c0_i32_0 : i32, i32
  }
  func.func @transform_8(%arg0: i32) -> (i32, i32) {
    %c0_i32 = arith.constant 0 : i32
    %c0_i32_0 = arith.constant 0 : i32
    %c0_i32_1 = arith.constant 0 : i32
    return %c0_i32, %c0_i32_0 : i32, i32
  }
  func.func @transform_9(%arg0: i32) -> (i32, i32) {
    %c0_i32 = arith.constant 0 : i32
    %c0_i32_0 = arith.constant 0 : i32
    %c0_i32_1 = arith.constant 0 : i32
    return %c0_i32, %c0_i32_0 : i32, i32
  }
  func.func @transform_10(%arg0: i32) -> (i32, i32) {
    %c0_i32 = arith.constant 0 : i32
    %c0_i32_0 = arith.constant 0 : i32
    %c0_i32_1 = arith.constant 0 : i32
    return %c0_i32, %c0_i32_0 : i32, i32
  }
  func.func @transform_11(%arg0: i32) -> (i32, i32) {
    %c0_i32 = arith.constant 0 : i32
    %c0_i32_0 = arith.constant 0 : i32
    %c0_i32_1 = arith.constant 0 : i32
    return %c0_i32, %c0_i32_0 : i32, i32
  }
  func.func @transform_12(%arg0: i32) -> (i32, i32) {
    %c0_i32 = arith.constant 0 : i32
    %c0_i32_0 = arith.constant 0 : i32
    return %arg0, %c0_i32 : i32, i32
  }
}

</mosaic_0001>

<llo_original>
// kernel: deep_biod_head.1
$region0: #{deep_biod_head.1}
  #allocation0 [shape = 'u32[]', space=smem, size = 0x4, offset = 0x4, fixed_abs, tag = 'smem constant byte address 0x4 - core index']
  #allocation1 [shape = 'u32[144,128]{1,0:T(1,128)}', space=vmem, size = 0x12000, scoped, tag = 'internal scratch']
  #allocation2 [shape = 'f32[1,1]{1,0:T(1,128)S(1)}', space=vmem, size = 0x200, scoped, tag = 'scoped memory for deep_biod_head.1']
  %s0 = inlined_call_operand.vmem [shape: bf16[8,64], index: 0, kind: input, shape index: {}]
  %s1 = inlined_call_operand.vmem [shape: f32[8,128], index: 1, kind: input, shape index: {}]
  %s2 = inlined_call_operand.vmem [shape: f32[8,64], index: 2, kind: input, shape index: {}]
  %s3 = inlined_call_operand.vmem [shape: f32[8,32], index: 3, kind: input, shape index: {}]
  %s4 = inlined_call_operand.vmem [shape: bf16[64,128], index: 4, kind: input, shape index: {}]
  %s5 = inlined_call_operand.vmem [shape: f32[1,128], index: 5, kind: input, shape index: {}]
  %s6 = inlined_call_operand.vmem [shape: bf16[128,64], index: 6, kind: input, shape index: {}]
  %s7 = inlined_call_operand.vmem [shape: f32[1,64], index: 7, kind: input, shape index: {}]
  %s8 = inlined_call_operand.vmem [shape: bf16[64,32], index: 8, kind: input, shape index: {}]
  %s9 = inlined_call_operand.vmem [shape: f32[1,32], index: 9, kind: input, shape index: {}]
  %s10 = inlined_call_operand.vmem [shape: f32[1,32], index: 10, kind: input, shape index: {}]
  %s11 = inlined_call_operand.<no memory space> [shape: f32[1,1], index: 11, kind: input, shape index: {}]
  %s12 = inlined_call_operand.vmem [shape: f32[8,1], index: 12, kind: output, shape index: {}]
  %s13 = sld [smem:[#allocation0]]
  $region58: #{deep_biod_head.1} parent=0
    _
  %s15 = ssub.s32 1, %s13
  %s16 = scalar_select 0, %s15, %s13
  %v17 = vstv %s11
  %18 = vst [vmem:[#allocation2] sm:$0x1] %v17
  // Predicated region
  $region2: #{deep_biod_head.1} parent=0 // pred_check
    _
  $region3: #{deep_biod_head.1} parent=0 // pred_check_branch
    %20 = sbr.rel (0) target = $region5
  $region4: #{deep_biod_head.1} parent=0 // pred_region
    _
  $region5: #{deep_biod_head.1} parent=0 // pred_fallthru
    _
  // Predicated region
  $region6: #{deep_biod_head.1} parent=0 // pred_check
    _
  $region7: #{deep_biod_head.1} parent=0 // pred_check_branch
    %22 = sbr.rel (0) target = $region9
  $region8: #{deep_biod_head.1} parent=0 // pred_region
    _
  $region9: #{deep_biod_head.1} parent=0 // pred_fallthru
    _
  // Predicated region
  $region10: #{deep_biod_head.1} parent=0 // pred_check
    _
  $region11: #{deep_biod_head.1} parent=0 // pred_check_branch
    %24 = sbr.rel (0) target = $region13
  $region12: #{deep_biod_head.1} parent=0 // pred_region
    _
  $region13: #{deep_biod_head.1} parent=0 // pred_fallthru
    _
  // Predicated region
  $region14: #{deep_biod_head.1} parent=0 // pred_check
    _
  $region15: #{deep_biod_head.1} parent=0 // pred_check_branch
    %26 = sbr.rel (0) target = $region17
  $region16: #{deep_biod_head.1} parent=0 // pred_region
    _
  $region17: #{deep_biod_head.1} parent=0 // pred_fallthru
    _
  // Predicated region
  $region18: #{deep_biod_head.1} parent=0 // pred_check
    _
  $region19: #{deep_biod_head.1} parent=0 // pred_check_branch
    %28 = sbr.rel (0) target = $region21
  $region20: #{deep_biod_head.1} parent=0 // pred_region
    _
  $region21: #{deep_biod_head.1} parent=0 // pred_fallthru
    _
  // Predicated region
  $region22: #{deep_biod_head.1} parent=0 // pred_check
    _
  $region23: #{deep_biod_head.1} parent=0 // pred_check_branch
    %30 = sbr.rel (0) target = $region25
  $region24: #{deep_biod_head.1} parent=0 // pred_region
    _
  $region25: #{deep_biod_head.1} parent=0 // pred_fallthru
    _
  // Predicated region
  $region26: #{deep_biod_head.1} parent=0 // pred_check
    _
  $region27: #{deep_biod_head.1} parent=0 // pred_check_branch
    %32 = sbr.rel (0) target = $region29
  $region28: #{deep_biod_head.1} parent=0 // pred_region
    _
  $region29: #{deep_biod_head.1} parent=0 // pred_fallthru
    _
  // Predicated region
  $region30: #{deep_biod_head.1} parent=0 // pred_check
    _
  $region31: #{deep_biod_head.1} parent=0 // pred_check_branch
    %34 = sbr.rel (0) target = $region33
  $region32: #{deep_biod_head.1} parent=0 // pred_region
    _
  $region33: #{deep_biod_head.1} parent=0 // pred_fallthru
    _
  // Predicated region
  $region34: #{deep_biod_head.1} parent=0 // pred_check
    _
  $region35: #{deep_biod_head.1} parent=0 // pred_check_branch
    %36 = sbr.rel (0) target = $region37
  $region36: #{deep_biod_head.1} parent=0 // pred_region
    _
  $region37: #{deep_biod_head.1} parent=0 // pred_fallthru
    _
  // Predicated region
  $region38: #{deep_biod_head.1} parent=0 // pred_check
    _
  $region39: #{deep_biod_head.1} parent=0 // pred_check_branch
    %38 = sbr.rel (0) target = $region41
  $region40: #{deep_biod_head.1} parent=0 // pred_region
    _
  $region41: #{deep_biod_head.1} parent=0 // pred_fallthru
    _
  // Predicated region
  $region42: #{deep_biod_head.1} parent=0 // pred_check
    _
  $region43: #{deep_biod_head.1} parent=0 // pred_check_branch
    %40 = sbr.rel (0) target = $region45
  $region44: #{deep_biod_head.1} parent=0 // pred_region
    _
  $region45: #{deep_biod_head.1} parent=0 // pred_fallthru
    _
  // Predicated region
  $region46: #{deep_biod_head.1} parent=0 // pred_check
    _
  $region47: #{deep_biod_head.1} parent=0 // pred_check_branch
    %42 = sbr.rel (0) target = $region49
  $region48: #{deep_biod_head.1} parent=0 // pred_region
    _
  $region49: #{deep_biod_head.1} parent=0 // pred_fallthru
    _
  %v44 = vld [vmem:[%s0] sm:$0xf]
  %v45 = vld [vmem:[%s4] sm:$0xf]
  %v46 = vld [vmem:[%s4 + $0x4] sm:$0xf]
  %v47 = vld [vmem:[%s4 + $0x8] sm:$0xf]
  %v48 = vld [vmem:[%s4 + $0xc] sm:$0xf]
  %v49 = vld [vmem:[%s4 + $0x10] sm:$0xf]
  %v50 = vld [vmem:[%s4 + $0x14] sm:$0xf]
  %v51 = vld [vmem:[%s4 + $0x18] sm:$0xf]
  %v52 = vld [vmem:[%s4 + $0x1c] sm:$0xf]
  %v53 = vld [vmem:[%s5] sm:$0x1]
  %v55 = vlaneseq
  %v56 = vshrl.u32 %v55, 7
  %v57 = vsub.s32 0, %v56
  %v58 = vrot.slane %v53, %v57
  %v68 = vunpack.c.l.b16 %v45
  %v69 = vunpack.c.l.b16 %v46
  %v70 = vunpack.c.l.b16 %v47
  %v71 = vunpack.c.l.b16 %v48
  %v72 = vunpack.c.l.b16 %v49
  %v73 = vunpack.c.l.b16 %v50
  %v74 = vunpack.c.l.b16 %v51
  %v75 = vunpack.c.l.b16 %v52
  %v76 = vpack.c.b16 %v69, %v68
  %v77 = vpack.c.b16 %v71, %v70
  %v78 = vpack.c.b16 %v73, %v72
  %v79 = vpack.c.b16 %v75, %v74
  %vm84 = vcmask 523264
  %v86 = vsel %vm84, %v44, 0
  %88 = vmatprep.subr.bf16.mxu0 0
  %89 = vmatpush1.bf16.msra.mxu0 0
  %90 = vmatprep.subr.bf16.mxu0 0
  %91 = vmatpush1.bf16.msra.mxu0 0
  %92 = vmatprep.subr.bf16.mxu0 0
  %93 = vmatpush1.bf16.msra.mxu0 0
  %94 = vmatprep.subr.bf16.mxu0 0
  %95 = vmatpush1.bf16.msra.mxu0 0
  %96 = vmatprep.subr.bf16.mxu0 0
  %97 = vmatpush1.bf16.msra.mxu0 %v79
  %98 = vmatprep.subr.bf16.mxu0 0
  %99 = vmatpush1.bf16.msra.mxu0 %v78
  %100 = vmatprep.subr.bf16.mxu0 0
  %101 = vmatpush1.bf16.msra.mxu0 %v77
  %102 = vmatprep.subr.bf16.mxu0 0
  %103 = vmatpush1.bf16.msra.mxu0 %v76
  %104 = vmatprep.subr.bf16.mxu0 0
  %105 = vmatpush2.bf16.msra.mxu0 0
  %106 = vmatprep.subr.bf16.mxu0 0
  %107 = vmatpush2.bf16.msra.mxu0 0
  %108 = vmatprep.subr.bf16.mxu0 0
  %109 = vmatpush2.bf16.msra.mxu0 0
  %110 = vmatprep.subr.bf16.mxu0 0
  %111 = vmatpush2.bf16.msra.mxu0 0
  %112 = vmatprep.subr.bf16.mxu0 0
  %113 = vmatpush2.bf16.msra.mxu0 0
  %114 = vmatprep.subr.bf16.mxu0 0
  %115 = vmatpush2.bf16.msra.mxu0 0
  %116 = vmatprep.subr.bf16.mxu0 0
  %117 = vmatpush2.bf16.msra.mxu0 0
  %118 = vmatprep.subr.bf16.mxu0 0
  %119 = vmatpush2.bf16.msra.mxu0 0
  %120 = vmatprep.mubr.bf16.mxu0 0
  %121 = vmatmul.mubr.bf16.gmra.mxu0 %v86
  %v122 = vpop.f32.mrf.mxu0
  %v123 = vadd.f32 %v58, %v122
  %v124 = vpop.f32.mrf.mxu0
  %v125 = vpop.f32.mrf.mxu0
  %v126 = vpop.f32.mrf.mxu0
  %127 = vdwg.mxu0
  %v128 = vmax.f32 %v123, 0.0
  %v129 = vld [vmem:[%s1] sm:$0xff]
  %vm130 = vcmp.ge.f32.partialorder %v129, 0.5
  %v131 = vsel %vm130, %v128, 0.0
  %v132 = vpack.c.bf16 %v131, %v131
  %v133 = vld [vmem:[%s6] sm:$0xf]
  %v134 = vld [vmem:[%s6 + $0x4] sm:$0xf]
  %v135 = vld [vmem:[%s6 + $0x8] sm:$0xf]
  %v136 = vld [vmem:[%s6 + $0xc] sm:$0xf]
  %v137 = vld [vmem:[%s6 + $0x10] sm:$0xf]
  %v138 = vld [vmem:[%s6 + $0x14] sm:$0xf]
  %v139 = vld [vmem:[%s6 + $0x18] sm:$0xf]
  %v140 = vld [vmem:[%s6 + $0x1c] sm:$0xf]
  %v141 = vld [vmem:[%s6 + $0x20] sm:$0xf]
  %v142 = vld [vmem:[%s6 + $0x24] sm:$0xf]
  %v143 = vld [vmem:[%s6 + $0x28] sm:$0xf]
  %v144 = vld [vmem:[%s6 + $0x2c] sm:$0xf]
  %v145 = vld [vmem:[%s6 + $0x30] sm:$0xf]
  %v146 = vld [vmem:[%s6 + $0x34] sm:$0xf]
  %v147 = vld [vmem:[%s6 + $0x38] sm:$0xf]
  %v148 = vld [vmem:[%s6 + $0x3c] sm:$0xf]
  %v149 = vld [vmem:[%s7] sm:$0x1]
  %v151 = vlaneseq
  %v152 = vshrl.u32 %v151, 7
  %v153 = vsub.s32 0, %v152
  %v154 = vrot.slane %v149, %v153
  %v172 = vunpack.c.l.b16 %v133
  %v173 = vunpack.c.l.b16 %v134
  %v174 = vunpack.c.l.b16 %v135
  %v175 = vunpack.c.l.b16 %v136
  %v176 = vunpack.c.l.b16 %v137
  %v177 = vunpack.c.l.b16 %v138
  %v178 = vunpack.c.l.b16 %v139
  %v179 = vunpack.c.l.b16 %v140
  %v180 = vunpack.c.l.b16 %v141
  %v181 = vunpack.c.l.b16 %v142
  %v182 = vunpack.c.l.b16 %v143
  %v183 = vunpack.c.l.b16 %v144
  %v184 = vunpack.c.l.b16 %v145
  %v185 = vunpack.c.l.b16 %v146
  %v186 = vunpack.c.l.b16 %v147
  %v187 = vunpack.c.l.b16 %v148
  %v188 = vpack.c.b16 %v173, %v172
  %v189 = vpack.c.b16 %v175, %v174
  %v190 = vpack.c.b16 %v177, %v176
  %v191 = vpack.c.b16 %v179, %v178
  %v192 = vpack.c.b16 %v181, %v180
  %v193 = vpack.c.b16 %v183, %v182
  %v194 = vpack.c.b16 %v185, %v184
  %v195 = vpack.c.b16 %v187, %v186
  %204 = vmatprep.subr.bf16.mxu0 0
  %205 = vmatpush1.bf16.msra.mxu0 %v195
  %206 = vmatprep.subr.bf16.mxu0 0
  %207 = vmatpush1.bf16.msra.mxu0 %v194
  %208 = vmatprep.subr.bf16.mxu0 0
  %209 = vmatpush1.bf16.msra.mxu0 %v193
  %210 = vmatprep.subr.bf16.mxu0 0
  %211 = vmatpush1.bf16.msra.mxu0 %v192
  %212 = vmatprep.subr.bf16.mxu0 0
  %213 = vmatpush1.bf16.msra.mxu0 %v191
  %214 = vmatprep.subr.bf16.mxu0 0
  %215 = vmatpush1.bf16.msra.mxu0 %v190
  %216 = vmatprep.subr.bf16.mxu0 0
  %217 = vmatpush1.bf16.msra.mxu0 %v189
  %218 = vmatprep.subr.bf16.mxu0 0
  %219 = vmatpush1.bf16.msra.mxu0 %v188
  %220 = vmatprep.subr.bf16.mxu0 0
  %221 = vmatpush2.bf16.msra.mxu0 0
  %222 = vmatprep.subr.bf16.mxu0 0
  %223 = vmatpush2.bf16.msra.mxu0 0
  %224 = vmatprep.subr.bf16.mxu0 0
  %225 = vmatpush2.bf16.msra.mxu0 0
  %226 = vmatprep.subr.bf16.mxu0 0
  %227 = vmatpush2.bf16.msra.mxu0 0
  %228 = vmatprep.subr.bf16.mxu0 0
  %229 = vmatpush2.bf16.msra.mxu0 0
  %230 = vmatprep.subr.bf16.mxu0 0
  %231 = vmatpush2.bf16.msra.mxu0 0
  %232 = vmatprep.subr.bf16.mxu0 0
  %233 = vmatpush2.bf16.msra.mxu0 0
  %234 = vmatprep.subr.bf16.mxu0 0
  %235 = vmatpush2.bf16.msra.mxu0 0
  %236 = vmatprep.mubr.bf16.mxu0 0
  %237 = vmatmul.mubr.bf16.gmra.mxu0 %v132
  %v238 = vpop.f32.mrf.mxu0
  %v239 = vadd.f32 %v154, %v238
  %v240 = vpop.f32.mrf.mxu0
  %v241 = vpop.f32.mrf.mxu0
  %v242 = vpop.f32.mrf.mxu0
  %243 = vdwg.mxu0
  %v244 = vmax.f32 %v239, 0.0
  %v245 = vld [vmem:[%s2] sm:$0xff]
  %vm246 = vcmp.ge.f32.partialorder %v245, 0.5
  %v247 = vsel %vm246, %v244, 0.0
  %v248 = vpack.c.bf16 %v247, %v247
  %v249 = vld [vmem:[%s8] sm:$0xf]
  %v250 = vld [vmem:[%s8 + $0x4] sm:$0xf]
  %v251 = vld [vmem:[%s8 + $0x8] sm:$0xf]
  %v252 = vld [vmem:[%s8 + $0xc] sm:$0xf]
  %v253 = vld [vmem:[%s8 + $0x10] sm:$0xf]
  %v254 = vld [vmem:[%s8 + $0x14] sm:$0xf]
  %v255 = vld [vmem:[%s8 + $0x18] sm:$0xf]
  %v256 = vld [vmem:[%s8 + $0x1c] sm:$0xf]
  %v257 = vld [vmem:[%s9] sm:$0x1]
  %v259 = vlaneseq
  %v260 = vshrl.u32 %v259, 7
  %v261 = vsub.s32 0, %v260
  %v262 = vrot.slane %v257, %v261
  %v272 = vunpack.c.l.b16 %v249
  %v273 = vunpack.c.l.b16 %v250
  %v274 = vunpack.c.l.b16 %v251
  %v275 = vunpack.c.l.b16 %v252
  %v276 = vunpack.c.l.b16 %v253
  %v277 = vunpack.c.l.b16 %v254
  %v278 = vunpack.c.l.b16 %v255
  %v279 = vunpack.c.l.b16 %v256
  %v280 = vpack.c.b16 %v273, %v272
  %v281 = vpack.c.b16 %v275, %v274
  %v282 = vpack.c.b16 %v277, %v276
  %v283 = vpack.c.b16 %v279, %v278
  %v289 = vsel %vm84, %v248, 0
  %291 = vmatprep.subr.bf16.mxu0 0
  %292 = vmatpush1.bf16.msra.mxu0 0
  %293 = vmatprep.subr.bf16.mxu0 0
  %294 = vmatpush1.bf16.msra.mxu0 0
  %295 = vmatprep.subr.bf16.mxu0 0
  %296 = vmatpush1.bf16.msra.mxu0 0
  %297 = vmatprep.subr.bf16.mxu0 0
  %298 = vmatpush1.bf16.msra.mxu0 0
  %299 = vmatprep.subr.bf16.mxu0 0
  %300 = vmatpush1.bf16.msra.mxu0 %v283
  %301 = vmatprep.subr.bf16.mxu0 0
  %302 = vmatpush1.bf16.msra.mxu0 %v282
  %303 = vmatprep.subr.bf16.mxu0 0
  %304 = vmatpush1.bf16.msra.mxu0 %v281
  %305 = vmatprep.subr.bf16.mxu0 0
  %306 = vmatpush1.bf16.msra.mxu0 %v280
  %307 = vmatprep.subr.bf16.mxu0 0
  %308 = vmatpush2.bf16.msra.mxu0 0
  %309 = vmatprep.subr.bf16.mxu0 0
  %310 = vmatpush2.bf16.msra.mxu0 0
  %311 = vmatprep.subr.bf16.mxu0 0
  %312 = vmatpush2.bf16.msra.mxu0 0
  %313 = vmatprep.subr.bf16.mxu0 0
  %314 = vmatpush2.bf16.msra.mxu0 0
  %315 = vmatprep.subr.bf16.mxu0 0
  %316 = vmatpush2.bf16.msra.mxu0 0
  %317 = vmatprep.subr.bf16.mxu0 0
  %318 = vmatpush2.bf16.msra.mxu0 0
  %319 = vmatprep.subr.bf16.mxu0 0
  %320 = vmatpush2.bf16.msra.mxu0 0
  %321 = vmatprep.subr.bf16.mxu0 0
  %322 = vmatpush2.bf16.msra.mxu0 0
  %323 = vmatprep.mubr.bf16.mxu0 0
  %324 = vmatmul.mubr.bf16.gmra.mxu0 %v289
  %v325 = vpop.f32.mrf.mxu0
  %v326 = vadd.f32 %v262, %v325
  %v327 = vpop.f32.mrf.mxu0
  %v328 = vpop.f32.mrf.mxu0
  %v329 = vpop.f32.mrf.mxu0
  %330 = vdwg.mxu0
  %v331 = vmax.f32 %v326, 0.0
  %v332 = vld [vmem:[%s3] sm:$0xff]
  %vm333 = vcmp.ge.f32.partialorder %v332, 0.5
  %v334 = vsel %vm333, %v331, 0.0
  %v335 = vld [vmem:[%s10] sm:$0x1]
  %v337 = vlaneseq
  %v338 = vshrl.u32 %v337, 7
  %v339 = vsub.s32 0, %v338
  %v340 = vrot.slane %v335, %v339
  %v342 = vmul.f32 %v334, %v340
  %vm343 = vcmask 261120
  %v344 = vsel %vm343, %v342, 0.0
  %345 = vadd.xlane.f32.xlu0 %v344
  %v346 = vpop.xlane.xlu0 %345
  %v347 = vld [vmem:[#allocation2] sm:$0x1]
  %v349 = vlaneseq
  %v350 = vshrl.u32 %v349, 7
  %v351 = vsub.s32 0, %v350
  %v352 = vrot.slane %v347, %v351
  %v354 = vadd.f32 %v346, %v352
  %v355 = vsub.f32 0.0, %v354
  %v356 = vmul.f32 %v355, 1.442695
  %v357 = vpow.pop %v356
  %v358 = vadd.f32 %v357, 1.0
  %v359 = vrcp.pop %v358
  %v360 = vmul.f32 1.0, %v359
  %vm361 = vcmask 7168
  %362 = vst.msk [vmem:[%s12] sm:$0xff] %vm361, %v360
  // Predicated region
  $region50: #{deep_biod_head.1} parent=0 // pred_check
    _
  $region51: #{deep_biod_head.1} parent=0 // pred_check_branch
    %364 = sbr.rel (0) target = $region53
  $region52: #{deep_biod_head.1} parent=0 // pred_region
    _
  $region53: #{deep_biod_head.1} parent=0 // pred_fallthru
    _
  // Predicated region
  $region54: #{deep_biod_head.1} parent=0 // pred_check
    _
  $region55: #{deep_biod_head.1} parent=0 // pred_check_branch
    %366 = sbr.rel (0) target = $region57
  $region56: #{deep_biod_head.1} parent=0 // pred_region
    _
  $region57: #{deep_biod_head.1} parent=0 // pred_fallthru
    _

</llo_original>
